<compile_context>
chip_gen: v5e
topology: v5e:2x2
jax: 0.10.0
libtpu: 0.0.40
codegen_flags: <defaults>
</compile_context>

<pallas_src>
import functools

import jax
import jax.numpy as jnp
from jax.experimental import pallas as pl
from jax.experimental.pallas import tpu as pltpu

LN_EPS = 1e-5  # PyTorch nn.LayerNorm default


def _encoder_kernel(x_ref, w_in_t_ref, b_in_ref, w_res_t_ref, b_res_ref,
                    gamma_ref, beta_ref, w_out_t_ref, b_out_ref, o_ref,
                    *, n_res_layers, inv_d):
    """Transposed compute: positions (lanes) x features (sublanes).

    x_ref     : (in_dim, TM)  one batch's S-tile, features on sublanes
    w_*_t_ref : transposed Linear weights -> matmuls are (feat, feat) @ (feat, TM)
    o_ref     : (d_out, TM)   lane-dense output tile
    """

    def mm(w, a):
        # Cast the activation to the weight dtype (bf16 when the wrapper
        # narrowed the MXU operands, no-op for f32). Accumulate in f32.
        return jnp.dot(w, a.astype(w.dtype), preferred_element_type=jnp.float32)

    x = x_ref[...]                         # (in_dim, TM)

    # Hoist loop-invariant reads out of the unrolled residual loop.
    w_res_t = w_res_t_ref[...]             # (D, D)
    b_res = b_res_ref[...]                 # (D, 1) -> lane broadcast
    gamma = gamma_ref[...]                 # (D, 1)
    beta = beta_ref[...]                   # (D, 1)
    d_enc = w_res_t.shape[0]
    # (1, D) ones row: LayerNorm sums ride the otherwise-idle MXU instead of
    # the XLU/VPU cross-sublane reduce path.  Stats stay f32.
    ones_row = jnp.ones((1, d_enc), jnp.float32)

    # weight_in: Linear(in_dim -> D), transposed: (D, in_dim) @ (in_dim, TM).
    h = mm(w_in_t_ref[...], x) + b_in_ref[...]            # (D, TM) f32

    # Shared residual block applied n_res_layers times (weights shared).
    for _ in range(n_res_layers):
        y = mm(w_res_t, h) + b_res                         # (D, TM) f32
        # Two-pass LayerNorm over the feature (sublane) axis, sums on the MXU.
        mu = jnp.dot(ones_row, y, preferred_element_type=jnp.float32) * inv_d
        yc = y - mu                                        # (D, TM)
        var = jnp.dot(ones_row, yc * yc,
                      preferred_element_type=jnp.float32) * inv_d
        yn = yc * jax.lax.rsqrt(var + LN_EPS)
        h = h + jnp.maximum(yn * gamma + beta, 0.0)        # ReLU + residual, f32

    # out: Linear(D -> D_out), transposed: (D_out, D) @ (D, TM).
    o_ref[...] = (mm(w_out_t_ref[...], h) + b_out_ref[...]).astype(o_ref.dtype)


def _vmem_limit_bytes(tm, in_dim, d_enc, d_out, in_bytes, w_bytes, out_bytes):
    """Generation-aware VMEM budget (64 MiB/TC on v7x, 128 MiB on v5e/v6e)."""
    try:
        cap = int(pltpu.get_tpu_info().vmem_capacity_bytes)
    except Exception:  # interpret mode / AOT on CPU: assume the smallest part
        cap = 64 << 20
    tiles = tm * (in_dim * in_bytes + d_out * out_bytes)     # x tile + out tile
    params = ((in_dim * d_enc + d_enc * d_enc + d_enc * d_out) * w_bytes
              + (4 * d_enc + d_out) * 4)
    # x/out tiles double-buffered, weights (constant index_map) counted twice
    # to be safe, plus a handful of live (D, TM) f32 slabs and compiler scratch.
    est = 2 * tiles + 2 * params + 6 * tm * d_enc * 4 + (8 << 20)
    return int(min(max(est, 32 << 20), (cap * 3) // 4))


def encoder_forward(x, params, *, n_res_layers, tile_rows=2048,
                    use_bf16=True, out_dtype=None):
    """x: (B, in_dim, S). Returns (B, dim_encoder_out, S).

    use_bf16: narrow MXU operands (weights + matmul activations) to bf16;
              VPU math stays f32.  Set False for bit-tight f32 results.
    out_dtype: output dtype (default: x.dtype).  Pass jnp.bfloat16 to halve
               the output writeback stream if the consumer tolerates it.
    """
    w_in, b_in, w_res, b_res, gamma, beta, w_out, b_out = params
    in_dim, d_enc = w_in.shape
    d_out = w_out.shape[1]
    B, C, S = x.shape
    assert C == in_dim
    out_dtype = x.dtype if out_dtype is None else out_dtype

    # The PyTorch permute just moves the feature axis next to the rows; in the
    # transposed-compute layout (features on sublanes, positions on lanes) the
    # original (B, in_dim, S) layout is ALREADY what we want -> no transpose,
    # no reshape, no pad.  Grid over (B, S-tiles); the ragged last S-tile is
    # handled by Pallas (clipped writes), per-column compute is independent so
    # the padded lanes never contaminate valid outputs.
    if S <= int(tile_rows):
        tm, n_s = S, 1                       # whole S in one lane-dense block
    else:
        tm = max(128, (min(int(tile_rows), S) // 128) * 128)
        n_s = pl.cdiv(S, tm)

    mm_dtype = jnp.bfloat16 if use_bf16 else jnp.float32
    # Transposed weights so kernel matmuls are (feat, feat) @ (feat, TM).
    w_in_t = w_in.T.astype(mm_dtype)
    w_res_t = w_res.T.astype(mm_dtype)
    w_out_t = w_out.T.astype(mm_dtype)
    # Biases / LN params as (D, 1) columns (broadcast along lanes), f32.
    b_in2 = b_in.reshape(d_enc, 1).astype(jnp.float32)
    b_res2 = b_res.reshape(d_enc, 1).astype(jnp.float32)
    gamma2 = gamma.reshape(d_enc, 1).astype(jnp.float32)
    beta2 = beta.reshape(d_enc, 1).astype(jnp.float32)
    b_out2 = b_out.reshape(d_out, 1).astype(jnp.float32)

    kernel = functools.partial(_encoder_kernel, n_res_layers=n_res_layers,
                               inv_d=1.0 / float(d_enc))

    full2d = lambda shape: pl.BlockSpec(shape, lambda b, s: (0, 0))

    in_bytes = jnp.dtype(x.dtype).itemsize
    w_bytes = jnp.dtype(mm_dtype).itemsize
    out_bytes = jnp.dtype(out_dtype).itemsize
    flops = 2 * B * S * (in_dim * d_enc
                         + n_res_layers * d_enc * d_enc
                         + d_enc * d_out)
    bytes_accessed = (B * S * in_dim * in_bytes
                      + B * S * d_out * out_bytes
                      + (in_dim * d_enc + d_enc * d_enc + d_enc * d_out) * w_bytes
                      + (4 * d_enc + d_out) * 4)
    transcendentals = B * S * n_res_layers   # one rsqrt per position per layer

    out = pl.pallas_call(
        kernel,
        out_shape=jax.ShapeDtypeStruct((B, d_out, S), out_dtype),
        grid_spec=pltpu.PrefetchScalarGridSpec(
            num_scalar_prefetch=0,
            grid=(B, n_s),
            in_specs=[
                # x tile: (in_dim, TM), lane-dense, straight from HBM layout.
                pl.BlockSpec((None, in_dim, tm), lambda b, s: (b, 0, s)),
                full2d((d_enc, in_dim)),   # w_in^T
                full2d((d_enc, 1)),        # b_in
                full2d((d_enc, d_enc)),    # w_res^T
                full2d((d_enc, 1)),        # b_res
                full2d((d_enc, 1)),        # gamma
                full2d((d_enc, 1)),        # beta
                full2d((d_out, d_enc)),    # w_out^T
                full2d((d_out, 1)),        # b_out
            ],
            out_specs=pl.BlockSpec((None, d_out, tm), lambda b, s: (b, 0, s)),
        ),
        compiler_params=pltpu.CompilerParams(
            dimension_semantics=("parallel", "parallel"),
            vmem_limit_bytes=_vmem_limit_bytes(tm, in_dim, d_enc, d_out,
                                               in_bytes, w_bytes, out_bytes)),
        cost_estimate=pl.CostEstimate(flops=int(flops),
                                      transcendentals=int(transcendentals),
                                      bytes_accessed=int(bytes_accessed)),
    )(x, w_in_t, b_in2, w_res_t, b_res2, gamma2, beta2, w_out_t, b_out2)

    return out


def init_params(key, in_dim, dim_encoder, dim_encoder_out):
    """Deterministic synthetic parameter init (shapes match nn.Linear/LayerNorm)."""
    ks = jax.random.split(key, 6)
    scale_in = 1.0 / jnp.sqrt(in_dim)
    scale_enc = 1.0 / jnp.sqrt(dim_encoder)
    w_in = jax.random.uniform(ks[0], (in_dim, dim_encoder), jnp.float32,
                              -scale_in, scale_in)
    b_in = jax.random.uniform(ks[1], (dim_encoder,), jnp.float32,
                              -scale_in, scale_in)
    w_res = jax.random.uniform(ks[2], (dim_encoder, dim_encoder), jnp.float32,
                               -scale_enc, scale_enc)
    b_res = jax.random.uniform(ks[3], (dim_encoder,), jnp.float32,
                               -scale_enc, scale_enc)
    gamma = jnp.ones((dim_encoder,), jnp.float32)   # LayerNorm default weight
    beta = jnp.zeros((dim_encoder,), jnp.float32)   # LayerNorm default bias
    w_out = jax.random.uniform(ks[4], (dim_encoder, dim_encoder_out), jnp.float32,
                               -scale_enc, scale_enc)
    b_out = jax.random.uniform(ks[5], (dim_encoder_out,), jnp.float32,
                               -scale_enc, scale_enc)
    return (w_in, b_in, w_res, b_res, gamma, beta, w_out, b_out)


def encoder_reference(x, params, *, n_res_layers):
    """Pure-JAX reference mirroring the PyTorch forward, for sanity checking."""
    w_in, b_in, w_res, b_res, gamma, beta, w_out, b_out = params
    h = jnp.swapaxes(x, 1, -1) @ w_in + b_in
    for _ in range(n_res_layers):
        y = h @ w_res + b_res
        mu = jnp.mean(y, axis=-1, keepdims=True)
        var = jnp.mean((y - mu) ** 2, axis=-1, keepdims=True)
        y = (y - mu) / jnp.sqrt(var + LN_EPS) * gamma + beta
        h = h + jnp.maximum(y, 0.0)
    o = h @ w_out + b_out
    return jnp.swapaxes(o, 1, -1)


if __name__ == "__main__":
    # Small shapes consistent with the module's forward:
    #   in_dim=4, n_res_layers=2, dim_encoder=32, dim_encoder_out=8
    #   input x: (batch=2, in_dim=4, seq=16)
    B, in_dim, S = 2, 4, 16
    n_res_layers, dim_encoder, dim_encoder_out = 2, 32, 8

    key = jax.random.PRNGKey(0)
    k_x, k_p = jax.random.split(key)
    x = jax.random.normal(k_x, (B, in_dim, S), jnp.float32)
    params = init_params(k_p, in_dim, dim_encoder, dim_encoder_out)

    ref = encoder_reference(x, params, n_res_layers=n_res_layers)

    # f32 MXU path: tight tolerance check.
    out_f32 = jax.block_until_ready(
        encoder_forward(x, params, n_res_layers=n_res_layers, use_bf16=False))
    assert out_f32.shape == (B, dim_encoder_out, S), out_f32.shape
    assert jnp.allclose(out_f32, ref, atol=1e-4, rtol=1e-4), "f32 mismatch vs ref"

    # Default production path (bf16 MXU operands): looser tolerance.
    out_bf16 = jax.block_until_ready(
        encoder_forward(x, params, n_res_layers=n_res_layers))
    assert out_bf16.shape == (B, dim_encoder_out, S), out_bf16.shape
    assert jnp.allclose(out_bf16, ref, atol=5e-2, rtol=5e-2), "bf16 mismatch vs ref"

    print("KERNEL_OK")
</pallas_src>

<mosaic_0001>
module attributes {stable_mosaic.version = 11 : i64} {
  func.func @_encoder_kernel(%arg0: i32, %arg1: i32, %arg2: memref<1x4x16xf32, #tpu.memory_space<vmem>>, %arg3: memref<32x4xf32, #tpu.memory_space<vmem>>, %arg4: memref<32x1xf32, #tpu.memory_space<vmem>>, %arg5: memref<32x32xf32, #tpu.memory_space<vmem>>, %arg6: memref<32x1xf32, #tpu.memory_space<vmem>>, %arg7: memref<32x1xf32, #tpu.memory_space<vmem>>, %arg8: memref<32x1xf32, #tpu.memory_space<vmem>>, %arg9: memref<8x32xf32, #tpu.memory_space<vmem>>, %arg10: memref<8x1xf32, #tpu.memory_space<vmem>>, %arg11: memref<1x8x16xf32, #tpu.memory_space<vmem>>) attributes {dimension_semantics = [#tpu.dimension_semantics<parallel>, #tpu.dimension_semantics<parallel>], iteration_bounds = array<i64: 2, 1>, scalar_prefetch = 0 : i64, scratch_operands = 0 : i64, tpu.core_type = #tpu.core_type<tc>, window_params = [{transform_indices = @transform_0, window_bounds = array<i64: 1, 4, 16>}, {pipeline_mode = #tpu.pipeline_mode<synchronous>, transform_indices = @transform_1, window_bounds = array<i64: 32, 4>}, {pipeline_mode = #tpu.pipeline_mode<synchronous>, transform_indices = @transform_2, window_bounds = array<i64: 32, 1>}, {pipeline_mode = #tpu.pipeline_mode<synchronous>, transform_indices = @transform_3, window_bounds = array<i64: 32, 32>}, {pipeline_mode = #tpu.pipeline_mode<synchronous>, transform_indices = @transform_4, window_bounds = array<i64: 32, 1>}, {pipeline_mode = #tpu.pipeline_mode<synchronous>, transform_indices = @transform_5, window_bounds = array<i64: 32, 1>}, {pipeline_mode = #tpu.pipeline_mode<synchronous>, transform_indices = @transform_6, window_bounds = array<i64: 32, 1>}, {pipeline_mode = #tpu.pipeline_mode<synchronous>, transform_indices = @transform_7, window_bounds = array<i64: 8, 32>}, {pipeline_mode = #tpu.pipeline_mode<synchronous>, transform_indices = @transform_8, window_bounds = array<i64: 8, 1>}, {transform_indices = @transform_9, window_bounds = array<i64: 1, 8, 16>}]} {
    %c0 = arith.constant 0 : index
    %c0_0 = arith.constant 0 : index
    %c0_1 = arith.constant 0 : index
    %0 = vector.load %arg2[%c0, %c0_0, %c0_1] : memref<1x4x16xf32, #tpu.memory_space<vmem>>, vector<1x4x16xf32>
    %1 = vector.shape_cast %0 : vector<1x4x16xf32> to vector<4x16xf32>
    %c0_2 = arith.constant 0 : index
    %c0_3 = arith.constant 0 : index
    %2 = vector.load %arg5[%c0_2, %c0_3] : memref<32x32xf32, #tpu.memory_space<vmem>>, vector<32x32xf32>
    %c0_4 = arith.constant 0 : index
    %c0_5 = arith.constant 0 : index
    %3 = vector.load %arg6[%c0_4, %c0_5] : memref<32x1xf32, #tpu.memory_space<vmem>>, vector<32x1xf32>
    %c0_6 = arith.constant 0 : index
    %c0_7 = arith.constant 0 : index
    %4 = vector.load %arg7[%c0_6, %c0_7] : memref<32x1xf32, #tpu.memory_space<vmem>>, vector<32x1xf32>
    %c0_8 = arith.constant 0 : index
    %c0_9 = arith.constant 0 : index
    %5 = vector.load %arg8[%c0_8, %c0_9] : memref<32x1xf32, #tpu.memory_space<vmem>>, vector<32x1xf32>
    %cst = arith.constant 1.000000e+00 : f32
    %6 = vector.broadcast %cst : f32 to vector<1x32xf32>
    %c0_10 = arith.constant 0 : index
    %c0_11 = arith.constant 0 : index
    %7 = vector.load %arg3[%c0_10, %c0_11] : memref<32x4xf32, #tpu.memory_space<vmem>>, vector<32x4xf32>
    %cst_12 = arith.constant dense<0.000000e+00> : vector<32x16xf32>
    %8 = tpu.matmul %7, %1, %cst_12 {dimension_numbers = #tpu.dot_dimension_numbers<[1], [0], [0], [1], [0, 0, 1, 1], [], []>} : vector<32x4xf32>, vector<4x16xf32>, vector<32x16xf32> -> vector<32x16xf32>
    %c0_13 = arith.constant 0 : index
    %c0_14 = arith.constant 0 : index
    %9 = vector.load %arg4[%c0_13, %c0_14] : memref<32x1xf32, #tpu.memory_space<vmem>>, vector<32x1xf32>
    %10 = vector.broadcast %9 : vector<32x1xf32> to vector<32x16xf32>
    %11 = arith.addf %8, %10 : vector<32x16xf32>
    %cst_15 = arith.constant dense<0.000000e+00> : vector<32x16xf32>
    %12 = tpu.matmul %2, %11, %cst_15 {dimension_numbers = #tpu.dot_dimension_numbers<[1], [0], [0], [1], [0, 0, 1, 1], [], []>} : vector<32x32xf32>, vector<32x16xf32>, vector<32x16xf32> -> vector<32x16xf32>
    %13 = vector.broadcast %3 : vector<32x1xf32> to vector<32x16xf32>
    %14 = arith.addf %12, %13 : vector<32x16xf32>
    %cst_16 = arith.constant dense<0.000000e+00> : vector<1x16xf32>
    %15 = tpu.matmul %6, %14, %cst_16 {dimension_numbers = #tpu.dot_dimension_numbers<[1], [0], [0], [1], [0, 0, 1, 1], [], []>} : vector<1x32xf32>, vector<32x16xf32>, vector<1x16xf32> -> vector<1x16xf32>
    %cst_17 = arith.constant 3.125000e-02 : f32
    %16 = vector.broadcast %cst_17 : f32 to vector<1x16xf32>
    %17 = arith.mulf %15, %16 : vector<1x16xf32>
    %18 = vector.broadcast %17 : vector<1x16xf32> to vector<32x16xf32>
    %19 = arith.subf %14, %18 : vector<32x16xf32>
    %20 = arith.mulf %19, %19 : vector<32x16xf32>
    %cst_18 = arith.constant dense<0.000000e+00> : vector<1x16xf32>
    %21 = tpu.matmul %6, %20, %cst_18 {dimension_numbers = #tpu.dot_dimension_numbers<[1], [0], [0], [1], [0, 0, 1, 1], [], []>} : vector<1x32xf32>, vector<32x16xf32>, vector<1x16xf32> -> vector<1x16xf32>
    %cst_19 = arith.constant 3.125000e-02 : f32
    %22 = vector.broadcast %cst_19 : f32 to vector<1x16xf32>
    %23 = arith.mulf %21, %22 : vector<1x16xf32>
    %cst_20 = arith.constant 9.99999974E-6 : f32
    %24 = vector.broadcast %cst_20 : f32 to vector<1x16xf32>
    %25 = arith.addf %23, %24 : vector<1x16xf32>
    %26 = math.rsqrt %25 : vector<1x16xf32>
    %27 = vector.broadcast %26 : vector<1x16xf32> to vector<32x16xf32>
    %28 = arith.mulf %19, %27 : vector<32x16xf32>
    %29 = vector.broadcast %4 : vector<32x1xf32> to vector<32x16xf32>
    %30 = arith.mulf %28, %29 : vector<32x16xf32>
    %31 = vector.broadcast %5 : vector<32x1xf32> to vector<32x16xf32>
    %32 = arith.addf %30, %31 : vector<32x16xf32>
    %cst_21 = arith.constant 0.000000e+00 : f32
    %33 = vector.broadcast %cst_21 : f32 to vector<32x16xf32>
    %34 = arith.maximumf %32, %33 : vector<32x16xf32>
    %35 = arith.addf %11, %34 : vector<32x16xf32>
    %cst_22 = arith.constant dense<0.000000e+00> : vector<32x16xf32>
    %36 = tpu.matmul %2, %35, %cst_22 {dimension_numbers = #tpu.dot_dimension_numbers<[1], [0], [0], [1], [0, 0, 1, 1], [], []>} : vector<32x32xf32>, vector<32x16xf32>, vector<32x16xf32> -> vector<32x16xf32>
    %37 = vector.broadcast %3 : vector<32x1xf32> to vector<32x16xf32>
    %38 = arith.addf %36, %37 : vector<32x16xf32>
    %cst_23 = arith.constant dense<0.000000e+00> : vector<1x16xf32>
    %39 = tpu.matmul %6, %38, %cst_23 {dimension_numbers = #tpu.dot_dimension_numbers<[1], [0], [0], [1], [0, 0, 1, 1], [], []>} : vector<1x32xf32>, vector<32x16xf32>, vector<1x16xf32> -> vector<1x16xf32>
    %cst_24 = arith.constant 3.125000e-02 : f32
    %40 = vector.broadcast %cst_24 : f32 to vector<1x16xf32>
    %41 = arith.mulf %39, %40 : vector<1x16xf32>
    %42 = vector.broadcast %41 : vector<1x16xf32> to vector<32x16xf32>
    %43 = arith.subf %38, %42 : vector<32x16xf32>
    %44 = arith.mulf %43, %43 : vector<32x16xf32>
    %cst_25 = arith.constant dense<0.000000e+00> : vector<1x16xf32>
    %45 = tpu.matmul %6, %44, %cst_25 {dimension_numbers = #tpu.dot_dimension_numbers<[1], [0], [0], [1], [0, 0, 1, 1], [], []>} : vector<1x32xf32>, vector<32x16xf32>, vector<1x16xf32> -> vector<1x16xf32>
    %cst_26 = arith.constant 3.125000e-02 : f32
    %46 = vector.broadcast %cst_26 : f32 to vector<1x16xf32>
    %47 = arith.mulf %45, %46 : vector<1x16xf32>
    %cst_27 = arith.constant 9.99999974E-6 : f32
    %48 = vector.broadcast %cst_27 : f32 to vector<1x16xf32>
    %49 = arith.addf %47, %48 : vector<1x16xf32>
    %50 = math.rsqrt %49 : vector<1x16xf32>
    %51 = vector.broadcast %50 : vector<1x16xf32> to vector<32x16xf32>
    %52 = arith.mulf %43, %51 : vector<32x16xf32>
    %53 = vector.broadcast %4 : vector<32x1xf32> to vector<32x16xf32>
    %54 = arith.mulf %52, %53 : vector<32x16xf32>
    %55 = vector.broadcast %5 : vector<32x1xf32> to vector<32x16xf32>
    %56 = arith.addf %54, %55 : vector<32x16xf32>
    %cst_28 = arith.constant 0.000000e+00 : f32
    %57 = vector.broadcast %cst_28 : f32 to vector<32x16xf32>
    %58 = arith.maximumf %56, %57 : vector<32x16xf32>
    %59 = arith.addf %35, %58 : vector<32x16xf32>
    %c0_29 = arith.constant 0 : index
    %c0_30 = arith.constant 0 : index
    %60 = vector.load %arg9[%c0_29, %c0_30] : memref<8x32xf32, #tpu.memory_space<vmem>>, vector<8x32xf32>
    %cst_31 = arith.constant dense<0.000000e+00> : vector<8x16xf32>
    %61 = tpu.matmul %60, %59, %cst_31 {dimension_numbers = #tpu.dot_dimension_numbers<[1], [0], [0], [1], [0, 0, 1, 1], [], []>} : vector<8x32xf32>, vector<32x16xf32>, vector<8x16xf32> -> vector<8x16xf32>
    %c0_32 = arith.constant 0 : index
    %c0_33 = arith.constant 0 : index
    %62 = vector.load %arg10[%c0_32, %c0_33] : memref<8x1xf32, #tpu.memory_space<vmem>>, vector<8x1xf32>
    %63 = vector.broadcast %62 : vector<8x1xf32> to vector<8x16xf32>
    %64 = arith.addf %61, %63 : vector<8x16xf32>
    %c0_34 = arith.constant 0 : index
    %c0_35 = arith.constant 0 : index
    %c0_36 = arith.constant 0 : index
    %65 = vector.load %arg11[%c0_34, %c0_35, %c0_36] : memref<1x8x16xf32, #tpu.memory_space<vmem>>, vector<1x8x16xf32>
    %66 = vector.shape_cast %65 : vector<1x8x16xf32> to vector<8x16xf32>
    %67 = vector.shape_cast %64 : vector<8x16xf32> to vector<1x8x16xf32>
    tpu.vector_store %arg11[%c0_34, %c0_35, %c0_36], %67 {strides = array<i32>} : memref<1x8x16xf32, #tpu.memory_space<vmem>>, vector<1x8x16xf32>,
    return
  }
  func.func @transform_0(%arg0: i32, %arg1: i32) -> (i32, i32, i32) {
    %c0_i32 = arith.constant 0 : i32
    %c0_i32_0 = arith.constant 0 : i32
    return %arg0, %c0_i32, %arg1 : i32, i32, i32
  }
  func.func @transform_1(%arg0: i32, %arg1: i32) -> (i32, i32) {
    %c0_i32 = arith.constant 0 : i32
    %c0_i32_0 = arith.constant 0 : i32
    %c0_i32_1 = arith.constant 0 : i32
    return %c0_i32, %c0_i32_0 : i32, i32
  }
  func.func @transform_2(%arg0: i32, %arg1: i32) -> (i32, i32) {
    %c0_i32 = arith.constant 0 : i32
    %c0_i32_0 = arith.constant 0 : i32
    %c0_i32_1 = arith.constant 0 : i32
    return %c0_i32, %c0_i32_0 : i32, i32
  }
  func.func @transform_3(%arg0: i32, %arg1: i32) -> (i32, i32) {
    %c0_i32 = arith.constant 0 : i32
    %c0_i32_0 = arith.constant 0 : i32
    %c0_i32_1 = arith.constant 0 : i32
    return %c0_i32, %c0_i32_0 : i32, i32
  }
  func.func @transform_4(%arg0: i32, %arg1: i32) -> (i32, i32) {
    %c0_i32 = arith.constant 0 : i32
    %c0_i32_0 = arith.constant 0 : i32
    %c0_i32_1 = arith.constant 0 : i32
    return %c0_i32, %c0_i32_0 : i32, i32
  }
  func.func @transform_5(%arg0: i32, %arg1: i32) -> (i32, i32) {
    %c0_i32 = arith.constant 0 : i32
    %c0_i32_0 = arith.constant 0 : i32
    %c0_i32_1 = arith.constant 0 : i32
    return %c0_i32, %c0_i32_0 : i32, i32
  }
  func.func @transform_6(%arg0: i32, %arg1: i32) -> (i32, i32) {
    %c0_i32 = arith.constant 0 : i32
    %c0_i32_0 = arith.constant 0 : i32
    %c0_i32_1 = arith.constant 0 : i32
    return %c0_i32, %c0_i32_0 : i32, i32
  }
  func.func @transform_7(%arg0: i32, %arg1: i32) -> (i32, i32) {
    %c0_i32 = arith.constant 0 : i32
    %c0_i32_0 = arith.constant 0 : i32
    %c0_i32_1 = arith.constant 0 : i32
    return %c0_i32, %c0_i32_0 : i32, i32
  }
  func.func @transform_8(%arg0: i32, %arg1: i32) -> (i32, i32) {
    %c0_i32 = arith.constant 0 : i32
    %c0_i32_0 = arith.constant 0 : i32
    %c0_i32_1 = arith.constant 0 : i32
    return %c0_i32, %c0_i32_0 : i32, i32
  }
  func.func @transform_9(%arg0: i32, %arg1: i32) -> (i32, i32, i32) {
    %c0_i32 = arith.constant 0 : i32
    %c0_i32_0 = arith.constant 0 : i32
    return %arg0, %c0_i32, %arg1 : i32, i32, i32
  }
}

</mosaic_0001>

<llo_original>
// kernel: tpu_custom_call.1
$region0: #{tpu_custom_call.1}
  #allocation0 [shape = 'u32[]', space=smem, size = 0x4, offset = 0x4, fixed_abs, tag = 'smem constant byte address 0x4 - core index']
  #allocation1 [shape = 'u32[72,128]{1,0:T(1,128)}', space=vmem, size = 0x9000, scoped, tag = 'internal scratch']
  %s0 = inlined_call_operand.vmem [shape: f32[2,4,16], index: 0, kind: input, shape index: {}]
  %s1 = inlined_call_operand.vmem [shape: f32[32,4], index: 1, kind: input, shape index: {}]
  %s2 = inlined_call_operand.vmem [shape: f32[32,1], index: 2, kind: input, shape index: {}]
  %s3 = inlined_call_operand.vmem [shape: f32[32,32], index: 3, kind: input, shape index: {}]
  %s4 = inlined_call_operand.vmem [shape: f32[32,1], index: 4, kind: input, shape index: {}]
  %s5 = inlined_call_operand.vmem [shape: f32[32,1], index: 5, kind: input, shape index: {}]
  %s6 = inlined_call_operand.vmem [shape: f32[32,1], index: 6, kind: input, shape index: {}]
  %s7 = inlined_call_operand.vmem [shape: f32[8,32], index: 7, kind: input, shape index: {}]
  %s8 = inlined_call_operand.vmem [shape: f32[8,1], index: 8, kind: input, shape index: {}]
  %s9 = inlined_call_operand.hbm [shape: f32[2,8,16], index: 9, kind: output, shape index: {}]
  %s10 = sld [smem:[#allocation0]]
  $region69: #{tpu_custom_call.1} parent=0
    _
  %s12 = ssub.s32 1, %s10
  %s13 = scalar_select 0, %s12, %s10
  $region1: #{tpu_custom_call.1} parent=0
    #allocation2 [shape = 'u8[8192]{0}', space=vmem, size = 0x2000, scoped, tag = 'output window, operand 0']
    #allocation3 [shape = 's32[2]{0}', space=sflag, size = 0x8, scoped, tag = 'scoped memory for tpu_custom_call.1']
    %14 = vsyncpa [#allocation3], 0
    %s15 = scalar_lea.sflag [#allocation3], 1
    %16 = vsyncpa %s15, 0
    loop: start=0, step=1, limit=4
    $region2: #{tpu_custom_call.1} parent=1 // loop_pre_header
      _
    $region3: #{tpu_custom_call.1} parent=1 // loop_header
      %s18 = sphi 0, %s22
      %p19 = scmp.ge.s32.totalorder %s18, 4
      %s25 = sphi 0, %s37
      %s26 = sphi 0, %s33
      %s27 = sphi 0, %s25
      %s28 = sphi 0, %s26
      %s29 = sphi 0, %s27
      %s30 = sphi 0, %s28
      %s42 = sphi 0, %s44
      %s45 = sphi 0, %s42
      %s46 = sphi 0, %s45
      %s62 = sphi 0, %s46
      %s66 = sphi 0, %s66
      %s68 = sphi 0, %s66
      %s69 = sphi 0, %s68
      %s83 = sphi 0, %s69
      %s87 = sphi 0, %s87
      %s89 = sphi 0, %s87
      %s90 = sphi 0, %s89
      %s104 = sphi 0, %s90
      %s108 = sphi 0, %s108
      %s110 = sphi 0, %s108
      %s111 = sphi 0, %s110
      %s125 = sphi 0, %s111
      %s129 = sphi 0, %s129
      %s131 = sphi 0, %s129
      %s132 = sphi 0, %s131
      %s146 = sphi 0, %s132
      %s150 = sphi 0, %s150
      %s152 = sphi 0, %s150
      %s153 = sphi 0, %s152
      %s167 = sphi 0, %s153
      %s171 = sphi 0, %s171
      %s173 = sphi 0, %s171
      %s174 = sphi 0, %s173
      %s188 = sphi 0, %s174
      %s192 = sphi 0, %s192
      %s194 = sphi 0, %s192
      %s195 = sphi 0, %s194
      %s209 = sphi 0, %s195
      %s213 = sphi 0, %s213
      %s215 = sphi 0, %s213
      %s216 = sphi 0, %s215
      %s230 = sphi 0, %s216
      %s238 = sphi 0, %s240
      %s241 = sphi 0, %s238
      %s242 = sphi 0, %s241
      %s258 = sphi 0, %s242
    $region4: #{tpu_custom_call.1} parent=1 // loop_header_branch
      %21 = sbr.rel (%p19) target = $region8
    $region5: #{tpu_custom_call.1} parent=1 // loop_body
      %s23 = ssub.s32 %s18, 1
      %s24 = ssub.s32 %s18, 2
      %s31 = sadd.s32 1, %s26
      %p32 = scmp.ge.s32.totalorder %s31, 1
      %s33 = scalar_select %p32, 0, %s31
      %s34 = sadd.s32 1, %s25
      %s35 = scalar_select %p32, %s34, %s25
      %p36 = scmp.ge.s32.totalorder %s35, 2
      %s37 = scalar_select %p36, 0, %s35
      %s38 = ssub.s32 %s25, %s37
      %s39 = ssub.s32 %s26, %s33
      %s40 = sor.u32 %s38, %s39
      %p41 = scmp.eq.s32.totalorder %s40, 0
      %s43 = sadd.s32 %s42, 1
      %s44 = scalar_select %p41, %s42, %s43
      %p47 = pneg %p41
      %p48 = scmp.eq.s32.totalorder %s18, 1
      %p49 = por %p47, %p48
      %p50 = scmp.ne.s32.totalorder %s42, %s45
      %p51 = scmp.eq.s32.totalorder %s18, 0
      %p52 = por %p50, %p51
      %p53 = scmp.ne.s32.totalorder %s42, %s45
      %p54 = scmp.eq.s32.totalorder %s23, 1
      %p55 = por %p53, %p54
      %p56 = scmp.ne.s32.totalorder %s45, %s46
      %p57 = scmp.eq.s32.totalorder %s23, 0
      %p58 = por %p56, %p57
      %p59 = scmp.ne.s32.totalorder %s45, %s46
      %p60 = scmp.eq.s32.totalorder %s24, 1
      %p61 = por %p59, %p60
      %p63 = scmp.ne.s32.totalorder %s46, %s62
      %p64 = scmp.eq.s32.totalorder %s24, 0
      %p65 = por %p63, %p64
      %s67 = sadd.s32 %s66, 1
      %p70 = scmp.eq.s32.totalorder %s18, 1
      %p71 = scmp.ne.s32.totalorder %s66, %s68
      %p72 = scmp.eq.s32.totalorder %s18, 0
      %p73 = por %p71, %p72
      %p74 = scmp.ne.s32.totalorder %s66, %s68
      %p75 = scmp.eq.s32.totalorder %s23, 1
      %p76 = por %p74, %p75
      %p77 = scmp.ne.s32.totalorder %s68, %s69
      %p78 = scmp.eq.s32.totalorder %s23, 0
      %p79 = por %p77, %p78
      %p80 = scmp.ne.s32.totalorder %s68, %s69
      %p81 = scmp.eq.s32.totalorder %s24, 1
      %p82 = por %p80, %p81
      %p84 = scmp.ne.s32.totalorder %s69, %s83
      %p85 = scmp.eq.s32.totalorder %s24, 0
      %p86 = por %p84, %p85
      %s88 = sadd.s32 %s87, 1
      %p91 = scmp.eq.s32.totalorder %s18, 1
      %p92 = scmp.ne.s32.totalorder %s87, %s89
      %p93 = scmp.eq.s32.totalorder %s18, 0
      %p94 = por %p92, %p93
      %p95 = scmp.ne.s32.totalorder %s87, %s89
      %p96 = scmp.eq.s32.totalorder %s23, 1
      %p97 = por %p95, %p96
      %p98 = scmp.ne.s32.totalorder %s89, %s90
      %p99 = scmp.eq.s32.totalorder %s23, 0
      %p100 = por %p98, %p99
      %p101 = scmp.ne.s32.totalorder %s89, %s90
      %p102 = scmp.eq.s32.totalorder %s24, 1
      %p103 = por %p101, %p102
      %p105 = scmp.ne.s32.totalorder %s90, %s104
      %p106 = scmp.eq.s32.totalorder %s24, 0
      %p107 = por %p105, %p106
      %s109 = sadd.s32 %s108, 1
      %p112 = scmp.eq.s32.totalorder %s18, 1
      %p113 = scmp.ne.s32.totalorder %s108, %s110
      %p114 = scmp.eq.s32.totalorder %s18, 0
      %p115 = por %p113, %p114
      %p116 = scmp.ne.s32.totalorder %s108, %s110
      %p117 = scmp.eq.s32.totalorder %s23, 1
      %p118 = por %p116, %p117
      %p119 = scmp.ne.s32.totalorder %s110, %s111
      %p120 = scmp.eq.s32.totalorder %s23, 0
      %p121 = por %p119, %p120
      %p122 = scmp.ne.s32.totalorder %s110, %s111
      %p123 = scmp.eq.s32.totalorder %s24, 1
      %p124 = por %p122, %p123
      %p126 = scmp.ne.s32.totalorder %s111, %s125
      %p127 = scmp.eq.s32.totalorder %s24, 0
      %p128 = por %p126, %p127
      %s130 = sadd.s32 %s129, 1
      %p133 = scmp.eq.s32.totalorder %s18, 1
      %p134 = scmp.ne.s32.totalorder %s129, %s131
      %p135 = scmp.eq.s32.totalorder %s18, 0
      %p136 = por %p134, %p135
      %p137 = scmp.ne.s32.totalorder %s129, %s131
      %p138 = scmp.eq.s32.totalorder %s23, 1
      %p139 = por %p137, %p138
      %p140 = scmp.ne.s32.totalorder %s131, %s132
      %p141 = scmp.eq.s32.totalorder %s23, 0
      %p142 = por %p140, %p141
      %p143 = scmp.ne.s32.totalorder %s131, %s132
      %p144 = scmp.eq.s32.totalorder %s24, 1
      %p145 = por %p143, %p144
      %p147 = scmp.ne.s32.totalorder %s132, %s146
      %p148 = scmp.eq.s32.totalorder %s24, 0
      %p149 = por %p147, %p148
      %s151 = sadd.s32 %s150, 1
      %p154 = scmp.eq.s32.totalorder %s18, 1
      %p155 = scmp.ne.s32.totalorder %s150, %s152
      %p156 = scmp.eq.s32.totalorder %s18, 0
      %p157 = por %p155, %p156
      %p158 = scmp.ne.s32.totalorder %s150, %s152
      %p159 = scmp.eq.s32.totalorder %s23, 1
      %p160 = por %p158, %p159
      %p161 = scmp.ne.s32.totalorder %s152, %s153
      %p162 = scmp.eq.s32.totalorder %s23, 0
      %p163 = por %p161, %p162
      %p164 = scmp.ne.s32.totalorder %s152, %s153
      %p165 = scmp.eq.s32.totalorder %s24, 1
      %p166 = por %p164, %p165
      %p168 = scmp.ne.s32.totalorder %s153, %s167
      %p169 = scmp.eq.s32.totalorder %s24, 0
      %p170 = por %p168, %p169
      %s172 = sadd.s32 %s171, 1
      %p175 = scmp.eq.s32.totalorder %s18, 1
      %p176 = scmp.ne.s32.totalorder %s171, %s173
      %p177 = scmp.eq.s32.totalorder %s18, 0
      %p178 = por %p176, %p177
      %p179 = scmp.ne.s32.totalorder %s171, %s173
      %p180 = scmp.eq.s32.totalorder %s23, 1
      %p181 = por %p179, %p180
      %p182 = scmp.ne.s32.totalorder %s173, %s174
      %p183 = scmp.eq.s32.totalorder %s23, 0
      %p184 = por %p182, %p183
      %p185 = scmp.ne.s32.totalorder %s173, %s174
      %p186 = scmp.eq.s32.totalorder %s24, 1
      %p187 = por %p185, %p186
      %p189 = scmp.ne.s32.totalorder %s174, %s188
      %p190 = scmp.eq.s32.totalorder %s24, 0
      %p191 = por %p189, %p190
      %s193 = sadd.s32 %s192, 1
      %p196 = scmp.eq.s32.totalorder %s18, 1
      %p197 = scmp.ne.s32.totalorder %s192, %s194
      %p198 = scmp.eq.s32.totalorder %s18, 0
      %p199 = por %p197, %p198
      %p200 = scmp.ne.s32.totalorder %s192, %s194
      %p201 = scmp.eq.s32.totalorder %s23, 1
      %p202 = por %p200, %p201
      %p203 = scmp.ne.s32.totalorder %s194, %s195
      %p204 = scmp.eq.s32.totalorder %s23, 0
      %p205 = por %p203, %p204
      %p206 = scmp.ne.s32.totalorder %s194, %s195
      %p207 = scmp.eq.s32.totalorder %s24, 1
      %p208 = por %p206, %p207
      %p210 = scmp.ne.s32.totalorder %s195, %s209
      %p211 = scmp.eq.s32.totalorder %s24, 0
      %p212 = por %p210, %p211
      %s214 = sadd.s32 %s213, 1
      %p217 = scmp.eq.s32.totalorder %s18, 1
      %p218 = scmp.ne.s32.totalorder %s213, %s215
      %p219 = scmp.eq.s32.totalorder %s18, 0
      %p220 = por %p218, %p219
      %p221 = scmp.ne.s32.totalorder %s213, %s215
      %p222 = scmp.eq.s32.totalorder %s23, 1
      %p223 = por %p221, %p222
      %p224 = scmp.ne.s32.totalorder %s215, %s216
      %p225 = scmp.eq.s32.totalorder %s23, 0
      %p226 = por %p224, %p225
      %p227 = scmp.ne.s32.totalorder %s215, %s216
      %p228 = scmp.eq.s32.totalorder %s24, 1
      %p229 = por %p227, %p228
      %p231 = scmp.ne.s32.totalorder %s216, %s230
      %p232 = scmp.eq.s32.totalorder %s24, 0
      %p233 = por %p231, %p232
      %s234 = ssub.s32 %s25, %s37
      %s235 = ssub.s32 %s26, %s33
      %s236 = sor.u32 %s234, %s235
      %p237 = scmp.eq.s32.totalorder %s236, 0
      %s239 = sadd.s32 %s238, 1
      %s240 = scalar_select %p237, %s238, %s239
      %p243 = pneg %p237
      %p244 = scmp.eq.s32.totalorder %s18, 1
      %p245 = por %p243, %p244
      %p246 = scmp.ne.s32.totalorder %s238, %s241
      %p247 = scmp.eq.s32.totalorder %s18, 0
      %p248 = por %p246, %p247
      %p249 = scmp.ne.s32.totalorder %s238, %s241
      %p250 = scmp.eq.s32.totalorder %s23, 1
      %p251 = por %p249, %p250
      %p252 = scmp.ne.s32.totalorder %s241, %s242
      %p253 = scmp.eq.s32.totalorder %s23, 0
      %p254 = por %p252, %p253
      %p255 = scmp.ne.s32.totalorder %s241, %s242
      %p256 = scmp.eq.s32.totalorder %s24, 1
      %p257 = por %p255, %p256
      %p259 = scmp.ne.s32.totalorder %s242, %s258
      %p260 = scmp.eq.s32.totalorder %s24, 0
      %p261 = por %p259, %p260
      %p262 = scmp.le.s32.totalorder 1, %s18
      %p263 = scmp.lt.s32.totalorder %s18, 3
      %p264 = pnand %p262, %p263
      %p265 = pneg %p264
      // Predicated region
      $region9: #{tpu_custom_call.1} parent=5 // pred_check
        _
      $region10: #{tpu_custom_call.1} parent=5 // pred_check_branch
        %267 = sbr.rel (%p264) target = $region12
      $region11: #{tpu_custom_call.1} parent=5 // pred_region
        %s268 = ssub.s32 %s18, 1
        // Predicated region
        $region13: #{tpu_custom_call.1} parent=11 // pred_check
          %p269 = pneg %p79
        $region14: #{tpu_custom_call.1} parent=11 // pred_check_branch
          %271 = sbr.rel (%p269) target = $region16
        $region15: #{tpu_custom_call.1} parent=11 // pred_region
          _
        $region16: #{tpu_custom_call.1} parent=11 // pred_fallthru
          _
        // Predicated region
        $region17: #{tpu_custom_call.1} parent=11 // pred_check
          %p272 = pneg %p100
        $region18: #{tpu_custom_call.1} parent=11 // pred_check_branch
          %274 = sbr.rel (%p272) target = $region20
        $region19: #{tpu_custom_call.1} parent=11 // pred_region
          _
        $region20: #{tpu_custom_call.1} parent=11 // pred_fallthru
          _
        // Predicated region
        $region21: #{tpu_custom_call.1} parent=11 // pred_check
          %p275 = pneg %p121
        $region22: #{tpu_custom_call.1} parent=11 // pred_check_branch
          %277 = sbr.rel (%p275) target = $region24
        $region23: #{tpu_custom_call.1} parent=11 // pred_region
          _
        $region24: #{tpu_custom_call.1} parent=11 // pred_fallthru
          _
        // Predicated region
        $region25: #{tpu_custom_call.1} parent=11 // pred_check
          %p278 = pneg %p142
        $region26: #{tpu_custom_call.1} parent=11 // pred_check_branch
          %280 = sbr.rel (%p278) target = $region28
        $region27: #{tpu_custom_call.1} parent=11 // pred_region
          _
        $region28: #{tpu_custom_call.1} parent=11 // pred_fallthru
          _
        // Predicated region
        $region29: #{tpu_custom_call.1} parent=11 // pred_check
          %p281 = pneg %p163
        $region30: #{tpu_custom_call.1} parent=11 // pred_check_branch
          %283 = sbr.rel (%p281) target = $region32
        $region31: #{tpu_custom_call.1} parent=11 // pred_region
          _
        $region32: #{tpu_custom_call.1} parent=11 // pred_fallthru
          _
        // Predicated region
        $region33: #{tpu_custom_call.1} parent=11 // pred_check
          %p284 = pneg %p184
        $region34: #{tpu_custom_call.1} parent=11 // pred_check_branch
          %286 = sbr.rel (%p284) target = $region36
        $region35: #{tpu_custom_call.1} parent=11 // pred_region
          _
        $region36: #{tpu_custom_call.1} parent=11 // pred_fallthru
          _
        // Predicated region
        $region37: #{tpu_custom_call.1} parent=11 // pred_check
          %p287 = pneg %p205
        $region38: #{tpu_custom_call.1} parent=11 // pred_check_branch
          %289 = sbr.rel (%p287) target = $region40
        $region39: #{tpu_custom_call.1} parent=11 // pred_region
          _
        $region40: #{tpu_custom_call.1} parent=11 // pred_fallthru
          _
        // Predicated region
        $region41: #{tpu_custom_call.1} parent=11 // pred_check
          %p290 = pneg %p226
        $region42: #{tpu_custom_call.1} parent=11 // pred_check_branch
          %292 = sbr.rel (%p290) target = $region44
        $region43: #{tpu_custom_call.1} parent=11 // pred_region
          _
        $region44: #{tpu_custom_call.1} parent=11 // pred_fallthru
          _
      $region12: #{tpu_custom_call.1} parent=5 // pred_fallthru
        _
      %p293 = scmp.lt.s32.totalorder %s18, 2
      // Predicated region
      $region45: #{tpu_custom_call.1} parent=5 // pred_check
        %p294 = pneg %p293
      $region46: #{tpu_custom_call.1} parent=5 // pred_check_branch
        %296 = sbr.rel (%p294) target = $region48
      $region47: #{tpu_custom_call.1} parent=5 // pred_region
        // Predicated region
        $region49: #{tpu_custom_call.1} parent=47 // pred_check
          %p297 = pneg %p52
        $region50: #{tpu_custom_call.1} parent=47 // pred_check_branch
          %299 = sbr.rel (%p297) target = $region52
        $region51: #{tpu_custom_call.1} parent=47 // pred_region
          %p300 = scmp.lt.s32.totalorder %s25, 1
          %s301 = scalar_select %p300, %s25, 1
          %p302 = scmp.lt.s32.totalorder %s26, 0
          %s303 = scalar_select %p302, %s26, 0
          %s304 = sadd.s32 %s303, %s301
          %s305 = smul.addr %s304, 4
          %s306 = scalar_lea.vmem %s0, %s305
        $region52: #{tpu_custom_call.1} parent=47 // pred_fallthru
          _
      $region48: #{tpu_custom_call.1} parent=5 // pred_fallthru
        _
      %p307 = scmp.le.s32.totalorder 1, %s18
      %p308 = scmp.lt.s32.totalorder %s18, 3
      %p309 = pnand %p307, %p308
      %p310 = pneg %p309
      // Predicated region
      $region53: #{tpu_custom_call.1} parent=5 // pred_check
        _
      $region54: #{tpu_custom_call.1} parent=5 // pred_check_branch
        %312 = sbr.rel (%p309) target = $region56
      $region55: #{tpu_custom_call.1} parent=5 // pred_region
        %s313 = ssub.s32 %s18, 1
        %p314 = scmp.lt.s32.totalorder %s27, 1
        %s315 = scalar_select %p314, %s27, 1
        %p316 = scmp.lt.s32.totalorder %s28, 0
        %s317 = scalar_select %p316, %s28, 0
        %s318 = sadd.s32 %s317, %s315
        %s319 = smul.addr %s318, 4
        %s320 = scalar_lea.vmem %s0, %s319
        %p321 = pneg %p58
        %p322 = pneg %p55
        %p323 = pneg %p79
        %p324 = pneg %p76
        %p325 = pneg %p100
        %p326 = pneg %p97
        %p327 = pneg %p121
        %p328 = pneg %p118
        %p329 = pneg %p142
        %p330 = pneg %p139
        %p331 = pneg %p163
        %p332 = pneg %p160
        %p333 = pneg %p184
        %p334 = pneg %p181
        %p335 = pneg %p205
        %p336 = pneg %p202
        %p337 = pneg %p226
        %p338 = pneg %p223
        %p339 = pneg %p254
        %p340 = pneg %p251
        %s341 = sand.u32 %s241, 1
        %s342 = scalar_lea.sflag [#allocation3], %s341
        %s343 = sand.u32 %s241, 1
        %s344 = smul.addr %s343, 8
        %s345 = scalar_lea.vmem [#allocation2], %s344
        %p346 = scmp.lt.s32.totalorder %s27, 1
        %s347 = scalar_select %p346, %s27, 1
        %p348 = scmp.lt.s32.totalorder %s28, 0
        %s349 = scalar_select %p348, %s28, 0
        %s350 = sadd.s32 %s349, %s347
        %s351 = smul.addr %s350, 4
        %s352 = scalar_lea.vmem %s0, %s351
        %v353 = vld [vmem:[%s352] sm:$0xf]
        %v354 = vld [vmem:[%s3] sm:$0xff]
        %v355 = vld [vmem:[%s3 + $0x8] sm:$0xff]
        %v356 = vld [vmem:[%s3 + $0x10] sm:$0xff]
        %v357 = vld [vmem:[%s3 + $0x18] sm:$0xff]
        %v358 = vld [vmem:[%s4] sm:$0xff]
        %v359 = vld [vmem:[%s4 + $0x8] sm:$0xff]
        %v360 = vld [vmem:[%s4 + $0x10] sm:$0xff]
        %v361 = vld [vmem:[%s4 + $0x18] sm:$0xff]
        %v362 = vld [vmem:[%s5] sm:$0xff]
        %v363 = vld [vmem:[%s5 + $0x8] sm:$0xff]
        %v364 = vld [vmem:[%s5 + $0x10] sm:$0xff]
        %v365 = vld [vmem:[%s5 + $0x18] sm:$0xff]
        %v366 = vld [vmem:[%s6] sm:$0xff]
        %v367 = vld [vmem:[%s6 + $0x8] sm:$0xff]
        %v368 = vld [vmem:[%s6 + $0x10] sm:$0xff]
        %v369 = vld [vmem:[%s6 + $0x18] sm:$0xff]
        %v370 = vld [vmem:[%s1] sm:$0xff]
        %v371 = vld [vmem:[%s1 + $0x8] sm:$0xff]
        %v372 = vld [vmem:[%s1 + $0x10] sm:$0xff]
        %v373 = vld [vmem:[%s1 + $0x18] sm:$0xff]
        %v374 = vld [vmem:[%s2] sm:$0xff]
        %v375 = vld [vmem:[%s2 + $0x8] sm:$0xff]
        %v376 = vld [vmem:[%s2 + $0x10] sm:$0xff]
        %v377 = vld [vmem:[%s2 + $0x18] sm:$0xff]
        %379 = vset.pattern.permute.xlu0 0
        %380 = vperm.xlu0 %379, %v374
        %v381 = vpop.permute.xlu0 %380
        %384 = vset.pattern.permute.xlu0 0
        %385 = vperm.xlu0 %384, %v375
        %v386 = vpop.permute.xlu0 %385
        %389 = vset.pattern.permute.xlu0 0
        %390 = vperm.xlu0 %389, %v376
        %v391 = vpop.permute.xlu0 %390
        %394 = vset.pattern.permute.xlu0 0
        %395 = vperm.xlu0 %394, %v377
        %v396 = vpop.permute.xlu0 %395
        %vm398 = vcmask 31744
        %v400 = vsel %vm398, %v370, 0
        %v403 = vsel %vm398, %v371, 0
        %v406 = vsel %vm398, %v372, 0
        %v409 = vsel %vm398, %v373, 0
        %vm411 = vcmask 1043456
        %v413 = vsel %vm411, %v353, 0
        %415 = vmatpush.msra.mxu0 0.0
        %416 = vmatpush.msra.mxu0 0.0
        %417 = vmatpush.msra.mxu0 0.0
        %418 = vmatpush.msra.mxu0 0.0
        %419 = vmatpush.msra.mxu0 0.0
        %420 = vmatpush.msra.mxu0 0.0
        %421 = vmatpush.msra.mxu0 0.0
        %422 = vmatpush.msra.mxu0 0.0
        %423 = vmatpush.msra.mxu0 0.0
        %424 = vmatpush.msra.mxu0 0.0
        %425 = vmatpush.msra.mxu0 0.0
        %426 = vmatpush.msra.mxu0 0.0
        %427 = vmatpush.msra.mxu0 0.0
        %428 = vmatpush.msra.mxu0 0.0
        %429 = vmatpush.msra.mxu0 0.0
        %430 = vmatpush.msra.mxu0 %v413
        %431 = vmatmul.f32.gmra.mxu0 %v400
        %v432 = vpop.f32.mrf.mxu0
        %v433 = vadd.f32 %v381, %v432
        %434 = vmatmul.f32.gmra.mxu0 %v403
        %v435 = vpop.f32.mrf.mxu0
        %v436 = vadd.f32 %v386, %v435
        %437 = vmatmul.f32.gmra.mxu0 %v406
        %v438 = vpop.f32.mrf.mxu0
        %v439 = vadd.f32 %v391, %v438
        %440 = vmatmul.f32.gmra.mxu0 %v409
        %v441 = vpop.f32.mrf.mxu0
        %v442 = vadd.f32 %v396, %v441
        %443 = vdwg.mxu0
        %445 = vset.pattern.permute.xlu0 0
        %446 = vperm.xlu0 %445, %v358
        %v447 = vpop.permute.xlu0 %446
        %450 = vset.pattern.permute.xlu0 0
        %451 = vperm.xlu0 %450, %v359
        %v452 = vpop.permute.xlu0 %451
        %455 = vset.pattern.permute.xlu0 0
        %456 = vperm.xlu0 %455, %v360
        %v457 = vpop.permute.xlu0 %456
        %460 = vset.pattern.permute.xlu0 0
        %461 = vperm.xlu0 %460, %v361
        %v462 = vpop.permute.xlu0 %461
        %vm464 = vcmask 261120
        %v466 = vsel %vm464, %v354, 0
        %v469 = vsel %vm464, %v355, 0
        %v472 = vsel %vm464, %v356, 0
        %v475 = vsel %vm464, %v357, 0
        %477 = vmatpush.msra.mxu0 0.0
        %478 = vmatpush.msra.mxu0 0.0
        %479 = vmatpush.msra.mxu0 0.0
        %480 = vmatpush.msra.mxu0 0.0
        %481 = vmatpush.msra.mxu0 0.0
        %482 = vmatpush.msra.mxu0 0.0
        %483 = vmatpush.msra.mxu0 0.0
        %484 = vmatpush.msra.mxu0 0.0
        %485 = vmatpush.msra.mxu0 0.0
        %486 = vmatpush.msra.mxu0 0.0
        %487 = vmatpush.msra.mxu0 0.0
        %488 = vmatpush.msra.mxu0 0.0
        %489 = vmatpush.msra.mxu0 %v442
        %490 = vmatpush.msra.mxu0 %v439
        %491 = vmatpush.msra.mxu0 %v436
        %492 = vmatpush.msra.mxu0 %v433
        %493 = vmatmul.f32.gmra.mxu0 %v466
        %v494 = vpop.f32.mrf.mxu0
        %v495 = vadd.f32 %v447, %v494
        %496 = vmatmul.f32.gmra.mxu0 %v469
        %v497 = vpop.f32.mrf.mxu0
        %v498 = vadd.f32 %v452, %v497
        %499 = vmatmul.f32.gmra.mxu0 %v472
        %v500 = vpop.f32.mrf.mxu0
        %v501 = vadd.f32 %v457, %v500
        %502 = vmatmul.f32.gmra.mxu0 %v475
        %v503 = vpop.f32.mrf.mxu0
        %v504 = vadd.f32 %v462, %v503
        %505 = vdwg.mxu0
        %v507 = vsel %vm464, 1.0, 0
        %509 = vmatpush.msra.mxu0 0.0
        %510 = vmatpush.msra.mxu0 0.0
        %511 = vmatpush.msra.mxu0 0.0
        %512 = vmatpush.msra.mxu0 0.0
        %513 = vmatpush.msra.mxu0 0.0
        %514 = vmatpush.msra.mxu0 0.0
        %515 = vmatpush.msra.mxu0 0.0
        %516 = vmatpush.msra.mxu0 0.0
        %517 = vmatpush.msra.mxu0 0.0
        %518 = vmatpush.msra.mxu0 0.0
        %519 = vmatpush.msra.mxu0 0.0
        %520 = vmatpush.msra.mxu0 0.0
        %521 = vmatpush.msra.mxu0 %v504
        %522 = vmatpush.msra.mxu0 %v501
        %523 = vmatpush.msra.mxu0 %v498
        %524 = vmatpush.msra.mxu0 %v495
        %525 = vmatmul.f32.gmra.mxu0 %v507
        %v526 = vpop.f32.mrf.mxu0
        %v527 = vadd.f32 0.0, %v526
        %528 = vdwg.mxu0
        %v529 = vmul.f32 %v527, 0.03125
        %v530 = vperm.slane %v529, 0
        %v531 = vsub.f32 %v495, %v530
        %v532 = vsub.f32 %v498, %v530
        %v533 = vsub.f32 %v501, %v530
        %v534 = vsub.f32 %v504, %v530
        %v535 = vmul.f32 %v531, %v531
        %v536 = vmul.f32 %v532, %v532
        %v537 = vmul.f32 %v533, %v533
        %v538 = vmul.f32 %v534, %v534
        %539 = vmatpush.msra.mxu0 0.0
        %540 = vmatpush.msra.mxu0 0.0
        %541 = vmatpush.msra.mxu0 0.0
        %542 = vmatpush.msra.mxu0 0.0
        %543 = vmatpush.msra.mxu0 0.0
        %544 = vmatpush.msra.mxu0 0.0
        %545 = vmatpush.msra.mxu0 0.0
        %546 = vmatpush.msra.mxu0 0.0
        %547 = vmatpush.msra.mxu0 0.0
        %548 = vmatpush.msra.mxu0 0.0
        %549 = vmatpush.msra.mxu0 0.0
        %550 = vmatpush.msra.mxu0 0.0
        %551 = vmatpush.msra.mxu0 %v538
        %552 = vmatpush.msra.mxu0 %v537
        %553 = vmatpush.msra.mxu0 %v536
        %554 = vmatpush.msra.mxu0 %v535
        %555 = vmatmul.f32.gmra.mxu0 %v507
        %v556 = vpop.f32.mrf.mxu0
        %v557 = vadd.f32 0.0, %v556
        %558 = vdwg.mxu0
        %v559 = vmul.f32 %v557, 0.03125
        %v560 = vadd.f32 %v559, 1e-05
        %v561 = vrsqrt.pop %v560
        %v562 = vmul.f32 %v561, %v560
        %v563 = vmul.f32 %v562, %v561
        %v564 = vmul.f32 0.5, %v563
        %v565 = vsub.f32 1.5, %v564
        %v566 = vmul.f32 %v561, %v565
        %vm567 = vweird.f32 %v560
        %vm568 = vweird.f32 %v561
        %vm569 = vmor %vm567, %vm568
        %v570 = vsel %vm569, %v561, %v566
        %v571 = vperm.slane %v570, 0
        %v572 = vmul.f32 %v531, %v571
        %v573 = vmul.f32 %v532, %v571
        %v574 = vmul.f32 %v533, %v571
        %v575 = vmul.f32 %v534, %v571
        %577 = vset.pattern.permute.xlu0 0
        %578 = vperm.xlu0 %577, %v362
        %v579 = vpop.permute.xlu0 %578
        %582 = vset.pattern.permute.xlu0 0
        %583 = vperm.xlu0 %582, %v363
        %v584 = vpop.permute.xlu0 %583
        %587 = vset.pattern.permute.xlu0 0
        %588 = vperm.xlu0 %587, %v364
        %v589 = vpop.permute.xlu0 %588
        %592 = vset.pattern.permute.xlu0 0
        %593 = vperm.xlu0 %592, %v365
        %v594 = vpop.permute.xlu0 %593
        %v596 = vmul.f32 %v572, %v579
        %v597 = vmul.f32 %v573, %v584
        %v598 = vmul.f32 %v574, %v589
        %v599 = vmul.f32 %v575, %v594
        %601 = vset.pattern.permute.xlu0 0
        %602 = vperm.xlu0 %601, %v366
        %v603 = vpop.permute.xlu0 %602
        %606 = vset.pattern.permute.xlu0 0
        %607 = vperm.xlu0 %606, %v367
        %v608 = vpop.permute.xlu0 %607
        %611 = vset.pattern.permute.xlu0 0
        %612 = vperm.xlu0 %611, %v368
        %v613 = vpop.permute.xlu0 %612
        %616 = vset.pattern.permute.xlu0 0
        %617 = vperm.xlu0 %616, %v369
        %v618 = vpop.permute.xlu0 %617
        %v620 = vadd.f32 %v596, %v603
        %v621 = vadd.f32 %v597, %v608
        %v622 = vadd.f32 %v598, %v613
        %v623 = vadd.f32 %v599, %v618
        %v624 = vmax.f32 %v620, 0.0
        %v625 = vmax.f32 %v621, 0.0
        %v626 = vmax.f32 %v622, 0.0
        %v627 = vmax.f32 %v623, 0.0
        %v628 = vadd.f32 %v433, %v624
        %v629 = vadd.f32 %v436, %v625
        %v630 = vadd.f32 %v439, %v626
        %v631 = vadd.f32 %v442, %v627
        %632 = vmatpush.msra.mxu0 0.0
        %633 = vmatpush.msra.mxu0 0.0
        %634 = vmatpush.msra.mxu0 0.0
        %635 = vmatpush.msra.mxu0 0.0
        %636 = vmatpush.msra.mxu0 0.0
        %637 = vmatpush.msra.mxu0 0.0
        %638 = vmatpush.msra.mxu0 0.0
        %639 = vmatpush.msra.mxu0 0.0
        %640 = vmatpush.msra.mxu0 0.0
        %641 = vmatpush.msra.mxu0 0.0
        %642 = vmatpush.msra.mxu0 0.0
        %643 = vmatpush.msra.mxu0 0.0
        %644 = vmatpush.msra.mxu0 %v631
        %645 = vmatpush.msra.mxu0 %v630
        %646 = vmatpush.msra.mxu0 %v629
        %647 = vmatpush.msra.mxu0 %v628
        %648 = vmatmul.f32.gmra.mxu0 %v466
        %v649 = vpop.f32.mrf.mxu0
        %v650 = vadd.f32 %v447, %v649
        %651 = vmatmul.f32.gmra.mxu0 %v469
        %v652 = vpop.f32.mrf.mxu0
        %v653 = vadd.f32 %v452, %v652
        %654 = vmatmul.f32.gmra.mxu0 %v472
        %v655 = vpop.f32.mrf.mxu0
        %v656 = vadd.f32 %v457, %v655
        %657 = vmatmul.f32.gmra.mxu0 %v475
        %v658 = vpop.f32.mrf.mxu0
        %v659 = vadd.f32 %v462, %v658
        %660 = vdwg.mxu0
        %661 = vmatpush.msra.mxu0 0.0
        %662 = vmatpush.msra.mxu0 0.0
        %663 = vmatpush.msra.mxu0 0.0
        %664 = vmatpush.msra.mxu0 0.0
        %665 = vmatpush.msra.mxu0 0.0
        %666 = vmatpush.msra.mxu0 0.0
        %667 = vmatpush.msra.mxu0 0.0
        %668 = vmatpush.msra.mxu0 0.0
        %669 = vmatpush.msra.mxu0 0.0
        %670 = vmatpush.msra.mxu0 0.0
        %671 = vmatpush.msra.mxu0 0.0
        %672 = vmatpush.msra.mxu0 0.0
        %673 = vmatpush.msra.mxu0 %v659
        %674 = vmatpush.msra.mxu0 %v656
        %675 = vmatpush.msra.mxu0 %v653
        %676 = vmatpush.msra.mxu0 %v650
        %677 = vmatmul.f32.gmra.mxu0 %v507
        %v678 = vpop.f32.mrf.mxu0
        %v679 = vadd.f32 0.0, %v678
        %680 = vdwg.mxu0
        %v681 = vmul.f32 %v679, 0.03125
        %v682 = vperm.slane %v681, 0
        %v683 = vsub.f32 %v650, %v682
        %v684 = vsub.f32 %v653, %v682
        %v685 = vsub.f32 %v656, %v682
        %v686 = vsub.f32 %v659, %v682
        %v687 = vmul.f32 %v683, %v683
        %v688 = vmul.f32 %v684, %v684
        %v689 = vmul.f32 %v685, %v685
        %v690 = vmul.f32 %v686, %v686
        %691 = vmatpush.msra.mxu0 0.0
        %692 = vmatpush.msra.mxu0 0.0
        %693 = vmatpush.msra.mxu0 0.0
        %694 = vmatpush.msra.mxu0 0.0
        %695 = vmatpush.msra.mxu0 0.0
        %696 = vmatpush.msra.mxu0 0.0
        %697 = vmatpush.msra.mxu0 0.0
        %698 = vmatpush.msra.mxu0 0.0
        %699 = vmatpush.msra.mxu0 0.0
        %700 = vmatpush.msra.mxu0 0.0
        %701 = vmatpush.msra.mxu0 0.0
        %702 = vmatpush.msra.mxu0 0.0
        %703 = vmatpush.msra.mxu0 %v690
        %704 = vmatpush.msra.mxu0 %v689
        %705 = vmatpush.msra.mxu0 %v688
        %706 = vmatpush.msra.mxu0 %v687
        %707 = vmatmul.f32.gmra.mxu0 %v507
        %v708 = vpop.f32.mrf.mxu0
        %v709 = vadd.f32 0.0, %v708
        %710 = vdwg.mxu0
        %v711 = vmul.f32 %v709, 0.03125
        %v712 = vadd.f32 %v711, 1e-05
        %v713 = vrsqrt.pop %v712
        %v714 = vmul.f32 %v713, %v712
        %v715 = vmul.f32 %v714, %v713
        %v716 = vmul.f32 0.5, %v715
        %v717 = vsub.f32 1.5, %v716
        %v718 = vmul.f32 %v713, %v717
        %vm719 = vweird.f32 %v712
        %vm720 = vweird.f32 %v713
        %vm721 = vmor %vm719, %vm720
        %v722 = vsel %vm721, %v713, %v718
        %v723 = vperm.slane %v722, 0
        %v724 = vmul.f32 %v683, %v723
        %v725 = vmul.f32 %v684, %v723
        %v726 = vmul.f32 %v685, %v723
        %v727 = vmul.f32 %v686, %v723
        %v728 = vmul.f32 %v724, %v579
        %v729 = vmul.f32 %v725, %v584
        %v730 = vmul.f32 %v726, %v589
        %v731 = vmul.f32 %v727, %v594
        %v732 = vadd.f32 %v728, %v603
        %v733 = vadd.f32 %v729, %v608
        %v734 = vadd.f32 %v730, %v613
        %v735 = vadd.f32 %v731, %v618
        %v736 = vmax.f32 %v732, 0.0
        %v737 = vmax.f32 %v733, 0.0
        %v738 = vmax.f32 %v734, 0.0
        %v739 = vmax.f32 %v735, 0.0
        %v740 = vadd.f32 %v628, %v736
        %v741 = vadd.f32 %v629, %v737
        %v742 = vadd.f32 %v630, %v738
        %v743 = vadd.f32 %v631, %v739
        %v744 = vld [vmem:[%s7] sm:$0xff]
        %v745 = vld [vmem:[%s8] sm:$0xff]
        %747 = vset.pattern.permute.xlu0 0
        %748 = vperm.xlu0 %747, %v745
        %v749 = vpop.permute.xlu0 %748
        %v752 = vsel %vm464, %v744, 0
        %754 = vmatpush.msra.mxu0 0.0
        %755 = vmatpush.msra.mxu0 0.0
        %756 = vmatpush.msra.mxu0 0.0
        %757 = vmatpush.msra.mxu0 0.0
        %758 = vmatpush.msra.mxu0 0.0
        %759 = vmatpush.msra.mxu0 0.0
        %760 = vmatpush.msra.mxu0 0.0
        %761 = vmatpush.msra.mxu0 0.0
        %762 = vmatpush.msra.mxu0 0.0
        %763 = vmatpush.msra.mxu0 0.0
        %764 = vmatpush.msra.mxu0 0.0
        %765 = vmatpush.msra.mxu0 0.0
        %766 = vmatpush.msra.mxu0 %v743
        %767 = vmatpush.msra.mxu0 %v742
        %768 = vmatpush.msra.mxu0 %v741
        %769 = vmatpush.msra.mxu0 %v740
        %770 = vmatmul.f32.gmra.mxu0 %v752
        %v771 = vpop.f32.mrf.mxu0
        %v772 = vadd.f32 %v749, %v771
        %773 = vdwg.mxu0
        %vm774 = vcmask 130048
        %775 = vst.msk [vmem:[%s345] sm:$0xff] %vm774, %v772
        %s776 = sand.u32 %s241, 1
        %s777 = scalar_lea.sflag [#allocation3], %s776
        %s778 = sand.u32 %s241, 1
        %s779 = smul.addr %s778, 8
        %s780 = scalar_lea.vmem [#allocation2], %s779
        // Predicated region
        $region57: #{tpu_custom_call.1} parent=55 // pred_check
          %p781 = pneg %p251
        $region58: #{tpu_custom_call.1} parent=55 // pred_check_branch
          %783 = sbr.rel (%p781) target = $region60
        $region59: #{tpu_custom_call.1} parent=55 // pred_region
          %785 = vsyncadd %s777, 0
          %s786 = sadd.s32 %s28, %s27
          %s787 = smul.addr %s786, 8
          %s788 = scalar_lea.hbm %s9, %s787
          %s790 = sshll.u32 %s780, 4
          %s791 = int_to_ptr.vmem [resolvable:$true] %s790
          %s792 = sshll.u32 %s788, 4
          %s793 = int_to_ptr.hbm [resolvable:$true] %s792
          %795 = dma.vmem_to_hbm [thread:$0]  %s791, 128, %s793, %s777
        $region60: #{tpu_custom_call.1} parent=55 // pred_fallthru
          _
      $region56: #{tpu_custom_call.1} parent=5 // pred_fallthru
        _
      %p796 = scmp.le.s32.totalorder 2, %s18
      // Predicated region
      $region61: #{tpu_custom_call.1} parent=5 // pred_check
        %p797 = pneg %p796
      $region62: #{tpu_custom_call.1} parent=5 // pred_check_branch
        %799 = sbr.rel (%p797) target = $region64
      $region63: #{tpu_custom_call.1} parent=5 // pred_region
        %s800 = ssub.s32 %s18, 2
        // Predicated region
        $region65: #{tpu_custom_call.1} parent=63 // pred_check
          %p801 = pneg %p257
        $region66: #{tpu_custom_call.1} parent=63 // pred_check_branch
          %803 = sbr.rel (%p801) target = $region68
        $region67: #{tpu_custom_call.1} parent=63 // pred_region
          %s804 = sand.u32 %s242, 1
          %s805 = scalar_lea.sflag [#allocation3], %s804
          %s806 = sand.u32 %s242, 1
          %s807 = smul.addr %s806, 8
          %s808 = scalar_lea.vmem [#allocation2], %s807
          %810 = dma.done %s805, 128
        $region68: #{tpu_custom_call.1} parent=63 // pred_fallthru
          _
      $region64: #{tpu_custom_call.1} parent=5 // pred_fallthru
        _
    $region6: #{tpu_custom_call.1} parent=1 // loop_footer
      %s22 = sadd.s32 1, %s18
    $region7: #{tpu_custom_call.1} parent=1 // loop_footer_branch
      %17 = sbr.rel target = $region3
    $region8: #{tpu_custom_call.1} parent=1 // loop_exit
      _
    %811 = vsyncpa [#allocation3], 1
    %s812 = scalar_lea.sflag [#allocation3], 1
    %813 = vsyncpa %s812, 1

</llo_original>
